<compile_context>
chip_gen: v5e
topology: v5e:2x2
jax: 0.10.0
libtpu: 0.0.40
codegen_flags: <defaults>
</compile_context>

<pallas_src>
import functools

import jax
import jax.numpy as jnp
from jax.experimental import pallas as pl
from jax.experimental.pallas import tpu as pltpu


def _round_up(x, m):
    return ((x + m - 1) // m) * m


# ----------------------------- Pallas kernel ------------------------------- #

def _proj_kernel(a_ref, w_ref, o_ref):
    """(tm, K) bf16 tokens @ (K, D) bf16 weight -> (tm, D) f32 output tile."""
    o_ref[...] = jnp.dot(
        a_ref[...], w_ref[...], preferred_element_type=jnp.float32
    ).astype(o_ref.dtype)


def pallas_linear(a, w, *, tm=256):
    """a: (M, K) tokens, w: (K, D) projection. Returns (M, D) f32 = a @ w."""
    M, K = a.shape
    K2, D = w.shape
    assert K == K2

    # One MXU-friendly row tile; clamp for tiny M (bf16 packs 16 rows/sublane).
    tm = min(tm, _round_up(max(M, 1), 16))
    m_pad = _round_up(M, tm)

    a_bf = a.astype(jnp.bfloat16)
    w_bf = w.astype(jnp.bfloat16)
    if m_pad != M:
        a_bf = jnp.pad(a_bf, ((0, m_pad - M), (0, 0)))

    grid = (m_pad // tm,)

    # VMEM: double-buffered A tile + resident weight + double-buffered O tile.
    vmem_est = 2 * tm * K * 2 + 2 * K * D * 2 + 2 * tm * D * 4 + (2 << 20)
    vmem_limit = int(min(max(vmem_est, 16 << 20), 48 << 20))

    cost = pl.CostEstimate(
        flops=2 * m_pad * K * D,
        transcendentals=0,
        bytes_accessed=m_pad * K * 2 + K * D * 2 + m_pad * D * 4,
    )

    out = pl.pallas_call(
        _proj_kernel,
        out_shape=jax.ShapeDtypeStruct((m_pad, D), jnp.float32),
        grid=grid,
        in_specs=[
            pl.BlockSpec((tm, K), lambda i: (i, 0)),   # activation row tile
            pl.BlockSpec((K, D), lambda i: (0, 0)),    # full weight, VMEM-resident
        ],
        out_specs=pl.BlockSpec((tm, D), lambda i: (i, 0)),  # lane-dense full-width store
        compiler_params=pltpu.CompilerParams(
            dimension_semantics=("parallel",),          # shard M over v7x's 2 TCs
            vmem_limit_bytes=vmem_limit,
            allow_input_fusion=[True, False],           # fold token transpose into input DMA
        ),
        cost_estimate=cost,
    )(a_bf, w_bf)

    return out[:M] if m_pad != M else out


# ------------------------- VisualAdapter forward --------------------------- #

def patch_encoder(x, patch_size):
    """Mirror of Patch.encoder: (B, C, H, W) -> (B, N, C*P*P).

    Token feature order is channel-major [c, ph, pw], identical to torch's
    unfold/unfold/reshape/transpose(1,2)/reshape chain.
    """
    B, C, H, W = x.shape
    P = patch_size
    assert H % P == 0 and W % P == 0
    x = x.reshape(B, C, H // P, P, W // P, P)            # (B,C,Hp,P,Wp,P)
    x = jnp.transpose(x, (0, 2, 4, 1, 3, 5))             # (B,Hp,Wp,C,P,P)
    return x.reshape(B, (H // P) * (W // P), C * P * P)  # (B,N,C*P*P)


def visual_adapter_forward(x, weight_t, patch_size):
    """x: (B, C, H, W) NCHW; weight_t: (C*P*P, text_dim) == torch weight.T."""
    B = x.shape[0]
    tokens = patch_encoder(x, patch_size)                # (B, N, K)
    N, K = tokens.shape[1], tokens.shape[2]
    out = pallas_linear(tokens.reshape(B * N, K), weight_t)
    return out.reshape(B, N, weight_t.shape[1])


# ---------------------------------- main ----------------------------------- #

if __name__ == "__main__":
    # Small shapes consistent with the module:
    #   img_size=32, patch_size=16, in_c=4, text_dim=256
    #   -> N_patches = (32/16)^2 = 4, K = 16*16*4 = 1024
    B, C, H, W = 2, 4, 32, 32
    patch_size = 16
    text_dim = 256
    K = patch_size * patch_size * C

    key = jax.random.PRNGKey(0)
    kx, kw = jax.random.split(key)
    x = jax.random.normal(kx, (B, C, H, W), dtype=jnp.float32)
    # nn.Linear(K, text_dim, bias=False): torch weight is (text_dim, K); we hold
    # its transpose (K, text_dim) so the kernel computes tokens @ W^T.
    weight_t = (jax.random.normal(kw, (K, text_dim), dtype=jnp.float32)
                * (1.0 / jnp.sqrt(K)))

    fwd = jax.jit(functools.partial(visual_adapter_forward,
                                    patch_size=patch_size))
    out = jax.block_until_ready(fwd(x, weight_t))

    N = (H // patch_size) * (W // patch_size)
    assert out.shape == (B, N, text_dim)

    tokens = patch_encoder(x, patch_size)
    # Reference matching kernel numerics: bf16-rounded inputs, f32 accumulation.
    ref_bf16 = jnp.einsum(
        "bnk,kd->bnd",
        tokens.astype(jnp.bfloat16).astype(jnp.float32),
        weight_t.astype(jnp.bfloat16).astype(jnp.float32),
    )
    # Full-f32 reference of the original module (looser tol due to bf16 inputs).
    ref_f32 = jnp.einsum("bnk,kd->bnd", tokens, weight_t)

    assert jnp.allclose(out, ref_bf16, atol=2e-3, rtol=2e-3), "bf16-ref mismatch"
    assert jnp.allclose(out, ref_f32, atol=5e-2, rtol=5e-2), "f32-ref mismatch"
    print("KERNEL_OK")
</pallas_src>

<mosaic_0001>
module attributes {stable_mosaic.version = 11 : i64} {
  func.func @_proj_kernel(%arg0: i32, %arg1: memref<16x1024xbf16, #tpu.memory_space<vmem>>, %arg2: memref<1024x256xbf16, #tpu.memory_space<vmem>>, %arg3: memref<16x256xf32, #tpu.memory_space<vmem>>) attributes {dimension_semantics = [#tpu.dimension_semantics<parallel>], iteration_bounds = array<i64: 1>, scalar_prefetch = 0 : i64, scratch_operands = 0 : i64, tpu.core_type = #tpu.core_type<tc>, window_params = [{transform_indices = @transform_0, window_bounds = array<i64: 16, 1024>}, {pipeline_mode = #tpu.pipeline_mode<synchronous>, transform_indices = @transform_1, window_bounds = array<i64: 1024, 256>}, {transform_indices = @transform_2, window_bounds = array<i64: 16, 256>}]} {
    %c0 = arith.constant 0 : index
    %c0_0 = arith.constant 0 : index
    %0 = vector.load %arg1[%c0, %c0_0] : memref<16x1024xbf16, #tpu.memory_space<vmem>>, vector<16x1024xbf16>
    %c0_1 = arith.constant 0 : index
    %c0_2 = arith.constant 0 : index
    %1 = vector.load %arg2[%c0_1, %c0_2] : memref<1024x256xbf16, #tpu.memory_space<vmem>>, vector<1024x256xbf16>
    %cst = arith.constant dense<0.000000e+00> : vector<16x256xf32>
    %2 = tpu.matmul %0, %1, %cst {dimension_numbers = #tpu.dot_dimension_numbers<[1], [0], [0], [1], [0, 0, 1, 1], [], []>} : vector<16x1024xbf16>, vector<1024x256xbf16>, vector<16x256xf32> -> vector<16x256xf32>
    %c0_3 = arith.constant 0 : index
    %c0_4 = arith.constant 0 : index
    %3 = vector.load %arg3[%c0_3, %c0_4] : memref<16x256xf32, #tpu.memory_space<vmem>>, vector<16x256xf32>
    tpu.vector_store %arg3[%c0_3, %c0_4], %2 {strides = array<i32>} : memref<16x256xf32, #tpu.memory_space<vmem>>, vector<16x256xf32>,
    return
  }
  func.func @transform_0(%arg0: i32) -> (i32, i32) {
    %c0_i32 = arith.constant 0 : i32
    %c0_i32_0 = arith.constant 0 : i32
    return %arg0, %c0_i32 : i32, i32
  }
  func.func @transform_1(%arg0: i32) -> (i32, i32) {
    %c0_i32 = arith.constant 0 : i32
    %c0_i32_0 = arith.constant 0 : i32
    %c0_i32_1 = arith.constant 0 : i32
    return %c0_i32, %c0_i32_0 : i32, i32
  }
  func.func @transform_2(%arg0: i32) -> (i32, i32) {
    %c0_i32 = arith.constant 0 : i32
    %c0_i32_0 = arith.constant 0 : i32
    return %arg0, %c0_i32 : i32, i32
  }
}

</mosaic_0001>

<llo_original>
// kernel: visual_adapter_forward.2
$region0: #{visual_adapter_forward.2}
  #allocation0 [shape = 'u32[]', space=smem, size = 0x4, offset = 0x4, fixed_abs, tag = 'smem constant byte address 0x4 - core index']
  #allocation1 [shape = 'u32[72,128]{1,0:T(1,128)}', space=vmem, size = 0x9000, scoped, tag = 'internal scratch']
  #allocation2 [shape = 'u32[2048]{0}', space=vmem, size = 0x2000, scoped, tag = 'scoped memory for visual_adapter_forward.2']
  #allocation3 [shape = 'u32[2048]{0}', space=vmem, size = 0x2000, scoped, tag = 'scoped memory for visual_adapter_forward.2']
  #allocation4 [shape = 'u32[2048]{0}', space=vmem, size = 0x2000, scoped, tag = 'scoped memory for visual_adapter_forward.2']
  #allocation5 [shape = 'u32[2048]{0}', space=vmem, size = 0x2000, scoped, tag = 'scoped memory for visual_adapter_forward.2']
  #allocation6 [shape = 'u32[2048]{0}', space=vmem, size = 0x2000, scoped, tag = 'scoped memory for visual_adapter_forward.2']
  %s0 = inlined_call_operand.vmem [shape: bf16[1024,256], index: 0, kind: input, shape index: {}]
  %s1 = inlined_call_operand.vmem [shape: bf16[8,1024], index: 1, kind: input, shape index: {}]
  %s2 = inlined_call_operand.<no memory space> [shape: bf16[], index: 2, kind: input, shape index: {}]
  %s3 = inlined_call_operand.vmem [shape: f32[16,256], index: 3, kind: output, shape index: {}]
  %s4 = sld [smem:[#allocation0]]
  $region18: #{visual_adapter_forward.2} parent=0
    _
  %s6 = ssub.s32 1, %s4
  %s7 = scalar_select 0, %s6, %s4
  %v8 = vstv %s2
  %v9 = vunpack.i.l.bf16 %v8
  %v11 = vunpack.i.h.bf16 %v8
  $region1: #{visual_adapter_forward.2} parent=0
    #allocation7 [shape = 'u8[32768]{0}', space=vmem, size = 0x8000, dematerialized = true, scoped, tag = 'FusionAdapter Buffer %fusion.1 = bf16[16,1024]{1,0:T(8,128)(2,1)} fusion(%param_1.1, %param_2), kind=kLoop, calls=%fused_computation.2.clone, metadata={op_name="jit(visual_adapter_forward)/jit(_pad)/pad" stack_frame_id=14}']
    // Predicated region
    $region2: #{visual_adapter_forward.2} parent=1 // pred_check
      _
    $region3: #{visual_adapter_forward.2} parent=1 // pred_check_branch
      %14 = sbr.rel (0) target = $region5
    $region4: #{visual_adapter_forward.2} parent=1 // pred_region
      _
    $region5: #{visual_adapter_forward.2} parent=1 // pred_fallthru
      _
    // Predicated region
    $region6: #{visual_adapter_forward.2} parent=1 // pred_check
      _
    $region7: #{visual_adapter_forward.2} parent=1 // pred_check_branch
      %16 = sbr.rel (0) target = $region9
    $region8: #{visual_adapter_forward.2} parent=1 // pred_region
      _
    $region9: #{visual_adapter_forward.2} parent=1 // pred_fallthru
      _
    %s18 = sor.u32 255, 127
    %s19 = sand.u32 %s18, 85
    %s20 = sshrl.u32 %s19, 1
    %s21 = sor.u32 %s19, %s20
    %s22 = sand.u32 51, %s21
    %s23 = sshrl.u32 %s22, 2
    %s24 = sor.u32 %s22, %s23
    %s25 = sand.u32 15, %s24
    %v26 = vld [vmem:[%s1] sm:%s25]
    %v27 = vunpack.c.l.bf16 %v26
    %v28 = vunpack.c.h.bf16 %v26
    %v29 = vpack.c.bf16 0.0, %v27
    %s31 = ssub.s32 16, 1
    %32 = vst [vmem:[#allocation7] sm:%s31] %v29
    %s33 = scalar_lea.vmem %s1, 4
    %s35 = sor.u32 255, 127
    %s36 = sand.u32 %s35, 85
    %s37 = sshrl.u32 %s36, 1
    %s38 = sor.u32 %s36, %s37
    %s39 = sand.u32 51, %s38
    %s40 = sshrl.u32 %s39, 2
    %s41 = sor.u32 %s39, %s40
    %s42 = sand.u32 15, %s41
    %v43 = vld [vmem:[%s33] sm:%s42]
    %v44 = vunpack.c.l.bf16 %v43
    %v45 = vunpack.c.h.bf16 %v43
    %s46 = scalar_lea.vmem [#allocation7], 4
    %v47 = vpack.c.bf16 0.0, %v44
    %s49 = ssub.s32 16, 1
    %50 = vst [vmem:[%s46] sm:%s49] %v47
    %s51 = scalar_lea.vmem %s1, 8
    %s53 = sor.u32 255, 127
    %s54 = sand.u32 %s53, 85
    %s55 = sshrl.u32 %s54, 1
    %s56 = sor.u32 %s54, %s55
    %s57 = sand.u32 51, %s56
    %s58 = sshrl.u32 %s57, 2
    %s59 = sor.u32 %s57, %s58
    %s60 = sand.u32 15, %s59
    %v61 = vld [vmem:[%s51] sm:%s60]
    %v62 = vunpack.c.l.bf16 %v61
    %v63 = vunpack.c.h.bf16 %v61
    %s64 = scalar_lea.vmem [#allocation7], 8
    %v65 = vpack.c.bf16 0.0, %v62
    %s67 = ssub.s32 16, 1
    %68 = vst [vmem:[%s64] sm:%s67] %v65
    %s69 = scalar_lea.vmem %s1, 12
    %s71 = sor.u32 255, 127
    %s72 = sand.u32 %s71, 85
    %s73 = sshrl.u32 %s72, 1
    %s74 = sor.u32 %s72, %s73
    %s75 = sand.u32 51, %s74
    %s76 = sshrl.u32 %s75, 2
    %s77 = sor.u32 %s75, %s76
    %s78 = sand.u32 15, %s77
    %v79 = vld [vmem:[%s69] sm:%s78]
    %v80 = vunpack.c.l.bf16 %v79
    %v81 = vunpack.c.h.bf16 %v79
    %s82 = scalar_lea.vmem [#allocation7], 12
    %v83 = vpack.c.bf16 0.0, %v80
    %s85 = ssub.s32 16, 1
    %86 = vst [vmem:[%s82] sm:%s85] %v83
    %s87 = scalar_lea.vmem %s1, 16
    %s89 = sor.u32 255, 127
    %s90 = sand.u32 %s89, 85
    %s91 = sshrl.u32 %s90, 1
    %s92 = sor.u32 %s90, %s91
    %s93 = sand.u32 51, %s92
    %s94 = sshrl.u32 %s93, 2
    %s95 = sor.u32 %s93, %s94
    %s96 = sand.u32 15, %s95
    %v97 = vld [vmem:[%s87] sm:%s96]
    %v98 = vunpack.c.l.bf16 %v97
    %v99 = vunpack.c.h.bf16 %v97
    %s100 = scalar_lea.vmem [#allocation7], 16
    %v101 = vpack.c.bf16 0.0, %v98
    %s103 = ssub.s32 16, 1
    %104 = vst [vmem:[%s100] sm:%s103] %v101
    %s105 = scalar_lea.vmem %s1, 20
    %s107 = sor.u32 255, 127
    %s108 = sand.u32 %s107, 85
    %s109 = sshrl.u32 %s108, 1
    %s110 = sor.u32 %s108, %s109
    %s111 = sand.u32 51, %s110
    %s112 = sshrl.u32 %s111, 2
    %s113 = sor.u32 %s111, %s112
    %s114 = sand.u32 15, %s113
    %v115 = vld [vmem:[%s105] sm:%s114]
    %v116 = vunpack.c.l.bf16 %v115
    %v117 = vunpack.c.h.bf16 %v115
    %s118 = scalar_lea.vmem [#allocation7], 20
    %v119 = vpack.c.bf16 0.0, %v116
    %s121 = ssub.s32 16, 1
    %122 = vst [vmem:[%s118] sm:%s121] %v119
    %s123 = scalar_lea.vmem %s1, 24
    %s125 = sor.u32 255, 127
    %s126 = sand.u32 %s125, 85
    %s127 = sshrl.u32 %s126, 1
    %s128 = sor.u32 %s126, %s127
    %s129 = sand.u32 51, %s128
    %s130 = sshrl.u32 %s129, 2
    %s131 = sor.u32 %s129, %s130
    %s132 = sand.u32 15, %s131
    %v133 = vld [vmem:[%s123] sm:%s132]
    %v134 = vunpack.c.l.bf16 %v133
    %v135 = vunpack.c.h.bf16 %v133
    %s136 = scalar_lea.vmem [#allocation7], 24
    %v137 = vpack.c.bf16 0.0, %v134
    %s139 = ssub.s32 16, 1
    %140 = vst [vmem:[%s136] sm:%s139] %v137
    %s141 = scalar_lea.vmem %s1, 28
    %s143 = sor.u32 255, 127
    %s144 = sand.u32 %s143, 85
    %s145 = sshrl.u32 %s144, 1
    %s146 = sor.u32 %s144, %s145
    %s147 = sand.u32 51, %s146
    %s148 = sshrl.u32 %s147, 2
    %s149 = sor.u32 %s147, %s148
    %s150 = sand.u32 15, %s149
    %v151 = vld [vmem:[%s141] sm:%s150]
    %v152 = vunpack.c.l.bf16 %v151
    %v153 = vunpack.c.h.bf16 %v151
    %s154 = scalar_lea.vmem [#allocation7], 28
    %v155 = vpack.c.bf16 0.0, %v152
    %s157 = ssub.s32 16, 1
    %158 = vst [vmem:[%s154] sm:%s157] %v155
    %s159 = scalar_lea.vmem [#allocation7], 32
    %v160 = vpack.c.bf16 0.0, %v9
    %s162 = ssub.s32 16, 1
    %163 = vst [vmem:[%s159] sm:%s162] %v160
    %s164 = scalar_lea.vmem [#allocation7], 36
    %v165 = vpack.c.bf16 0.0, %v9
    %s167 = ssub.s32 16, 1
    %168 = vst [vmem:[%s164] sm:%s167] %v165
    %s169 = scalar_lea.vmem [#allocation7], 40
    %v170 = vpack.c.bf16 0.0, %v9
    %s172 = ssub.s32 16, 1
    %173 = vst [vmem:[%s169] sm:%s172] %v170
    %s174 = scalar_lea.vmem [#allocation7], 44
    %v175 = vpack.c.bf16 0.0, %v9
    %s177 = ssub.s32 16, 1
    %178 = vst [vmem:[%s174] sm:%s177] %v175
    %s179 = scalar_lea.vmem [#allocation7], 48
    %v180 = vpack.c.bf16 0.0, %v9
    %s182 = ssub.s32 16, 1
    %183 = vst [vmem:[%s179] sm:%s182] %v180
    %s184 = scalar_lea.vmem [#allocation7], 52
    %v185 = vpack.c.bf16 0.0, %v9
    %s187 = ssub.s32 16, 1
    %188 = vst [vmem:[%s184] sm:%s187] %v185
    %s189 = scalar_lea.vmem [#allocation7], 56
    %v190 = vpack.c.bf16 0.0, %v9
    %s192 = ssub.s32 16, 1
    %193 = vst [vmem:[%s189] sm:%s192] %v190
    %s194 = scalar_lea.vmem [#allocation7], 60
    %v195 = vpack.c.bf16 0.0, %v9
    %s197 = ssub.s32 16, 1
    %198 = vst [vmem:[%s194] sm:%s197] %v195
    %v199 = vld [vmem:[#allocation7] sm:$0xff]
    %v200 = vld [vmem:[#allocation7 + $0x8] sm:$0xff]
    %v201 = vld [vmem:[#allocation7 + $0x10] sm:$0xff]
    %v202 = vld [vmem:[#allocation7 + $0x18] sm:$0xff]
    %v203 = vld [vmem:[#allocation7 + $0x20] sm:$0xff]
    %v204 = vld [vmem:[#allocation7 + $0x28] sm:$0xff]
    %v205 = vld [vmem:[#allocation7 + $0x30] sm:$0xff]
    %v206 = vld [vmem:[#allocation7 + $0x38] sm:$0xff]
    %v207 = vld [vmem:[%s0] sm:$0xff]
    %v208 = vld [vmem:[%s0 + $0x8] sm:$0xff]
    %v209 = vld [vmem:[%s0 + $0x10] sm:$0xff]
    %v210 = vld [vmem:[%s0 + $0x18] sm:$0xff]
    %v211 = vld [vmem:[%s0 + $0x20] sm:$0xff]
    %v212 = vld [vmem:[%s0 + $0x28] sm:$0xff]
    %v213 = vld [vmem:[%s0 + $0x30] sm:$0xff]
    %v214 = vld [vmem:[%s0 + $0x38] sm:$0xff]
    %v215 = vld [vmem:[%s0 + $0x40] sm:$0xff]
    %v216 = vld [vmem:[%s0 + $0x48] sm:$0xff]
    %v217 = vld [vmem:[%s0 + $0x50] sm:$0xff]
    %v218 = vld [vmem:[%s0 + $0x58] sm:$0xff]
    %v219 = vld [vmem:[%s0 + $0x60] sm:$0xff]
    %v220 = vld [vmem:[%s0 + $0x68] sm:$0xff]
    %v221 = vld [vmem:[%s0 + $0x70] sm:$0xff]
    %v222 = vld [vmem:[%s0 + $0x78] sm:$0xff]
    %v223 = vld [vmem:[%s0 + $0x80] sm:$0xff]
    %v224 = vld [vmem:[%s0 + $0x88] sm:$0xff]
    %v225 = vld [vmem:[%s0 + $0x90] sm:$0xff]
    %v226 = vld [vmem:[%s0 + $0x98] sm:$0xff]
    %v227 = vld [vmem:[%s0 + $0xa0] sm:$0xff]
    %v228 = vld [vmem:[%s0 + $0xa8] sm:$0xff]
    %v229 = vld [vmem:[%s0 + $0xb0] sm:$0xff]
    %v230 = vld [vmem:[%s0 + $0xb8] sm:$0xff]
    %v231 = vld [vmem:[%s0 + $0xc0] sm:$0xff]
    %v232 = vld [vmem:[%s0 + $0xc8] sm:$0xff]
    %v233 = vld [vmem:[%s0 + $0xd0] sm:$0xff]
    %v234 = vld [vmem:[%s0 + $0xd8] sm:$0xff]
    %v235 = vld [vmem:[%s0 + $0xe0] sm:$0xff]
    %v236 = vld [vmem:[%s0 + $0xe8] sm:$0xff]
    %v237 = vld [vmem:[%s0 + $0xf0] sm:$0xff]
    %v238 = vld [vmem:[%s0 + $0xf8] sm:$0xff]
    %v239 = vld [vmem:[%s0 + $0x100] sm:$0xff]
    %v240 = vld [vmem:[%s0 + $0x108] sm:$0xff]
    %v241 = vld [vmem:[%s0 + $0x110] sm:$0xff]
    %v242 = vld [vmem:[%s0 + $0x118] sm:$0xff]
    %v243 = vld [vmem:[%s0 + $0x120] sm:$0xff]
    %v244 = vld [vmem:[%s0 + $0x128] sm:$0xff]
    %v245 = vld [vmem:[%s0 + $0x130] sm:$0xff]
    %v246 = vld [vmem:[%s0 + $0x138] sm:$0xff]
    %v247 = vld [vmem:[%s0 + $0x140] sm:$0xff]
    %v248 = vld [vmem:[%s0 + $0x148] sm:$0xff]
    %v249 = vld [vmem:[%s0 + $0x150] sm:$0xff]
    %v250 = vld [vmem:[%s0 + $0x158] sm:$0xff]
    %v251 = vld [vmem:[%s0 + $0x160] sm:$0xff]
    %v252 = vld [vmem:[%s0 + $0x168] sm:$0xff]
    %v253 = vld [vmem:[%s0 + $0x170] sm:$0xff]
    %v254 = vld [vmem:[%s0 + $0x178] sm:$0xff]
    %v255 = vld [vmem:[%s0 + $0x180] sm:$0xff]
    %v256 = vld [vmem:[%s0 + $0x188] sm:$0xff]
    %v257 = vld [vmem:[%s0 + $0x190] sm:$0xff]
    %v258 = vld [vmem:[%s0 + $0x198] sm:$0xff]
    %v259 = vld [vmem:[%s0 + $0x1a0] sm:$0xff]
    %v260 = vld [vmem:[%s0 + $0x1a8] sm:$0xff]
    %v261 = vld [vmem:[%s0 + $0x1b0] sm:$0xff]
    %v262 = vld [vmem:[%s0 + $0x1b8] sm:$0xff]
    %v263 = vld [vmem:[%s0 + $0x1c0] sm:$0xff]
    %v264 = vld [vmem:[%s0 + $0x1c8] sm:$0xff]
    %v265 = vld [vmem:[%s0 + $0x1d0] sm:$0xff]
    %v266 = vld [vmem:[%s0 + $0x1d8] sm:$0xff]
    %v267 = vld [vmem:[%s0 + $0x1e0] sm:$0xff]
    %v268 = vld [vmem:[%s0 + $0x1e8] sm:$0xff]
    %v269 = vld [vmem:[%s0 + $0x1f0] sm:$0xff]
    %v270 = vld [vmem:[%s0 + $0x1f8] sm:$0xff]
    %v271 = vld [vmem:[%s0 + $0x200] sm:$0xff]
    %v272 = vld [vmem:[%s0 + $0x208] sm:$0xff]
    %v273 = vld [vmem:[%s0 + $0x210] sm:$0xff]
    %v274 = vld [vmem:[%s0 + $0x218] sm:$0xff]
    %v275 = vld [vmem:[%s0 + $0x220] sm:$0xff]
    %v276 = vld [vmem:[%s0 + $0x228] sm:$0xff]
    %v277 = vld [vmem:[%s0 + $0x230] sm:$0xff]
    %v278 = vld [vmem:[%s0 + $0x238] sm:$0xff]
    %v279 = vld [vmem:[%s0 + $0x240] sm:$0xff]
    %v280 = vld [vmem:[%s0 + $0x248] sm:$0xff]
    %v281 = vld [vmem:[%s0 + $0x250] sm:$0xff]
    %v282 = vld [vmem:[%s0 + $0x258] sm:$0xff]
    %v283 = vld [vmem:[%s0 + $0x260] sm:$0xff]
    %v284 = vld [vmem:[%s0 + $0x268] sm:$0xff]
    %v285 = vld [vmem:[%s0 + $0x270] sm:$0xff]
    %v286 = vld [vmem:[%s0 + $0x278] sm:$0xff]
    %v287 = vld [vmem:[%s0 + $0x280] sm:$0xff]
    %v288 = vld [vmem:[%s0 + $0x288] sm:$0xff]
    %v289 = vld [vmem:[%s0 + $0x290] sm:$0xff]
    %v290 = vld [vmem:[%s0 + $0x298] sm:$0xff]
    %v291 = vld [vmem:[%s0 + $0x2a0] sm:$0xff]
    %v292 = vld [vmem:[%s0 + $0x2a8] sm:$0xff]
    %v293 = vld [vmem:[%s0 + $0x2b0] sm:$0xff]
    %v294 = vld [vmem:[%s0 + $0x2b8] sm:$0xff]
    %v295 = vld [vmem:[%s0 + $0x2c0] sm:$0xff]
    %v296 = vld [vmem:[%s0 + $0x2c8] sm:$0xff]
    %v297 = vld [vmem:[%s0 + $0x2d0] sm:$0xff]
    %v298 = vld [vmem:[%s0 + $0x2d8] sm:$0xff]
    %v299 = vld [vmem:[%s0 + $0x2e0] sm:$0xff]
    %v300 = vld [vmem:[%s0 + $0x2e8] sm:$0xff]
    %v301 = vld [vmem:[%s0 + $0x2f0] sm:$0xff]
    %v302 = vld [vmem:[%s0 + $0x2f8] sm:$0xff]
    %v303 = vld [vmem:[%s0 + $0x300] sm:$0xff]
    %v304 = vld [vmem:[%s0 + $0x308] sm:$0xff]
    %v305 = vld [vmem:[%s0 + $0x310] sm:$0xff]
    %v306 = vld [vmem:[%s0 + $0x318] sm:$0xff]
    %v307 = vld [vmem:[%s0 + $0x320] sm:$0xff]
    %v308 = vld [vmem:[%s0 + $0x328] sm:$0xff]
    %v309 = vld [vmem:[%s0 + $0x330] sm:$0xff]
    %v310 = vld [vmem:[%s0 + $0x338] sm:$0xff]
    %v311 = vld [vmem:[%s0 + $0x340] sm:$0xff]
    %v312 = vld [vmem:[%s0 + $0x348] sm:$0xff]
    %v313 = vld [vmem:[%s0 + $0x350] sm:$0xff]
    %v314 = vld [vmem:[%s0 + $0x358] sm:$0xff]
    %v315 = vld [vmem:[%s0 + $0x360] sm:$0xff]
    %v316 = vld [vmem:[%s0 + $0x368] sm:$0xff]
    %v317 = vld [vmem:[%s0 + $0x370] sm:$0xff]
    %v318 = vld [vmem:[%s0 + $0x378] sm:$0xff]
    %v319 = vld [vmem:[%s0 + $0x380] sm:$0xff]
    %v320 = vld [vmem:[%s0 + $0x388] sm:$0xff]
    %v321 = vld [vmem:[%s0 + $0x390] sm:$0xff]
    %v322 = vld [vmem:[%s0 + $0x398] sm:$0xff]
    %v323 = vld [vmem:[%s0 + $0x3a0] sm:$0xff]
    %v324 = vld [vmem:[%s0 + $0x3a8] sm:$0xff]
    %v325 = vld [vmem:[%s0 + $0x3b0] sm:$0xff]
    %v326 = vld [vmem:[%s0 + $0x3b8] sm:$0xff]
    %v327 = vld [vmem:[%s0 + $0x3c0] sm:$0xff]
    %v328 = vld [vmem:[%s0 + $0x3c8] sm:$0xff]
    %v329 = vld [vmem:[%s0 + $0x3d0] sm:$0xff]
    %v330 = vld [vmem:[%s0 + $0x3d8] sm:$0xff]
    %v331 = vld [vmem:[%s0 + $0x3e0] sm:$0xff]
    %v332 = vld [vmem:[%s0 + $0x3e8] sm:$0xff]
    %v333 = vld [vmem:[%s0 + $0x3f0] sm:$0xff]
    %v334 = vld [vmem:[%s0 + $0x3f8] sm:$0xff]
    %v343 = vunpack.c.l.b16 %v199
    %v344 = vunpack.c.h.b16 %v199
    %v345 = vunpack.c.l.b16 %v200
    %v346 = vunpack.c.h.b16 %v200
    %v347 = vunpack.c.l.b16 %v201
    %v348 = vunpack.c.h.b16 %v201
    %v349 = vunpack.c.l.b16 %v202
    %v350 = vunpack.c.h.b16 %v202
    %v351 = vunpack.c.l.b16 %v203
    %v352 = vunpack.c.h.b16 %v203
    %v353 = vunpack.c.l.b16 %v204
    %v354 = vunpack.c.h.b16 %v204
    %v355 = vunpack.c.l.b16 %v205
    %v356 = vunpack.c.h.b16 %v205
    %v357 = vunpack.c.l.b16 %v206
    %v358 = vunpack.c.h.b16 %v206
    %v359 = vpack.c.b16 %v351, %v343
    %v360 = vpack.c.b16 %v352, %v344
    %v361 = vpack.c.b16 %v353, %v345
    %v362 = vpack.c.b16 %v354, %v346
    %v363 = vpack.c.b16 %v355, %v347
    %v364 = vpack.c.b16 %v356, %v348
    %v365 = vpack.c.b16 %v357, %v349
    %v366 = vpack.c.b16 %v358, %v350
    %v503 = vunpack.c.l.b16 %v207
    %v504 = vunpack.c.h.b16 %v207
    %v505 = vunpack.c.l.b16 %v208
    %v506 = vunpack.c.h.b16 %v208
    %v507 = vunpack.c.l.b16 %v209
    %v508 = vunpack.c.h.b16 %v209
    %v509 = vunpack.c.l.b16 %v210
    %v510 = vunpack.c.h.b16 %v210
    %v511 = vunpack.c.l.b16 %v211
    %v512 = vunpack.c.h.b16 %v211
    %v513 = vunpack.c.l.b16 %v212
    %v514 = vunpack.c.h.b16 %v212
    %v515 = vunpack.c.l.b16 %v213
    %v516 = vunpack.c.h.b16 %v213
    %v517 = vunpack.c.l.b16 %v214
    %v518 = vunpack.c.h.b16 %v214
    %v519 = vunpack.c.l.b16 %v215
    %v520 = vunpack.c.h.b16 %v215
    %v521 = vunpack.c.l.b16 %v216
    %v522 = vunpack.c.h.b16 %v216
    %v523 = vunpack.c.l.b16 %v217
    %v524 = vunpack.c.h.b16 %v217
    %v525 = vunpack.c.l.b16 %v218
    %v526 = vunpack.c.h.b16 %v218
    %v527 = vunpack.c.l.b16 %v219
    %v528 = vunpack.c.h.b16 %v219
    %v529 = vunpack.c.l.b16 %v220
    %v530 = vunpack.c.h.b16 %v220
    %v531 = vunpack.c.l.b16 %v221
    %v532 = vunpack.c.h.b16 %v221
    %v533 = vunpack.c.l.b16 %v222
    %v534 = vunpack.c.h.b16 %v222
    %v535 = vunpack.c.l.b16 %v223
    %v536 = vunpack.c.h.b16 %v223
    %v537 = vunpack.c.l.b16 %v224
    %v538 = vunpack.c.h.b16 %v224
    %v539 = vunpack.c.l.b16 %v225
    %v540 = vunpack.c.h.b16 %v225
    %v541 = vunpack.c.l.b16 %v226
    %v542 = vunpack.c.h.b16 %v226
    %v543 = vunpack.c.l.b16 %v227
    %v544 = vunpack.c.h.b16 %v227
    %v545 = vunpack.c.l.b16 %v228
    %v546 = vunpack.c.h.b16 %v228
    %v547 = vunpack.c.l.b16 %v229
    %v548 = vunpack.c.h.b16 %v229
    %v549 = vunpack.c.l.b16 %v230
    %v550 = vunpack.c.h.b16 %v230
    %v551 = vunpack.c.l.b16 %v231
    %v552 = vunpack.c.h.b16 %v231
    %v553 = vunpack.c.l.b16 %v232
    %v554 = vunpack.c.h.b16 %v232
    %v555 = vunpack.c.l.b16 %v233
    %v556 = vunpack.c.h.b16 %v233
    %v557 = vunpack.c.l.b16 %v234
    %v558 = vunpack.c.h.b16 %v234
    %v559 = vunpack.c.l.b16 %v235
    %v560 = vunpack.c.h.b16 %v235
    %v561 = vunpack.c.l.b16 %v236
    %v562 = vunpack.c.h.b16 %v236
    %v563 = vunpack.c.l.b16 %v237
    %v564 = vunpack.c.h.b16 %v237
    %v565 = vunpack.c.l.b16 %v238
    %v566 = vunpack.c.h.b16 %v238
    %v567 = vunpack.c.l.b16 %v239
    %v568 = vunpack.c.h.b16 %v239
    %v569 = vunpack.c.l.b16 %v240
    %v570 = vunpack.c.h.b16 %v240
    %v571 = vunpack.c.l.b16 %v241
    %v572 = vunpack.c.h.b16 %v241
    %v573 = vunpack.c.l.b16 %v242
    %v574 = vunpack.c.h.b16 %v242
    %v575 = vunpack.c.l.b16 %v243
    %v576 = vunpack.c.h.b16 %v243
    %v577 = vunpack.c.l.b16 %v244
    %v578 = vunpack.c.h.b16 %v244
    %v579 = vunpack.c.l.b16 %v245
    %v580 = vunpack.c.h.b16 %v245
    %v581 = vunpack.c.l.b16 %v246
    %v582 = vunpack.c.h.b16 %v246
    %v583 = vunpack.c.l.b16 %v247
    %v584 = vunpack.c.h.b16 %v247
    %v585 = vunpack.c.l.b16 %v248
    %v586 = vunpack.c.h.b16 %v248
    %v587 = vunpack.c.l.b16 %v249
    %v588 = vunpack.c.h.b16 %v249
    %v589 = vunpack.c.l.b16 %v250
    %v590 = vunpack.c.h.b16 %v250
    %v591 = vunpack.c.l.b16 %v251
    %v592 = vunpack.c.h.b16 %v251
    %v593 = vunpack.c.l.b16 %v252
    %v594 = vunpack.c.h.b16 %v252
    %v595 = vunpack.c.l.b16 %v253
    %v596 = vunpack.c.h.b16 %v253
    %v597 = vunpack.c.l.b16 %v254
    %v598 = vunpack.c.h.b16 %v254
    %v599 = vunpack.c.l.b16 %v255
    %v600 = vunpack.c.h.b16 %v255
    %v601 = vunpack.c.l.b16 %v256
    %v602 = vunpack.c.h.b16 %v256
    %v603 = vunpack.c.l.b16 %v257
    %v604 = vunpack.c.h.b16 %v257
    %v605 = vunpack.c.l.b16 %v258
    %v606 = vunpack.c.h.b16 %v258
    %v607 = vunpack.c.l.b16 %v259
    %v608 = vunpack.c.h.b16 %v259
    %v609 = vunpack.c.l.b16 %v260
    %v610 = vunpack.c.h.b16 %v260
    %v611 = vunpack.c.l.b16 %v261
    %v612 = vunpack.c.h.b16 %v261
    %v613 = vunpack.c.l.b16 %v262
    %v614 = vunpack.c.h.b16 %v262
    %v615 = vunpack.c.l.b16 %v263
    %v616 = vunpack.c.h.b16 %v263
    %v617 = vunpack.c.l.b16 %v264
    %v618 = vunpack.c.h.b16 %v264
    %v619 = vunpack.c.l.b16 %v265
    %v620 = vunpack.c.h.b16 %v265
    %v621 = vunpack.c.l.b16 %v266
    %v622 = vunpack.c.h.b16 %v266
    %v623 = vunpack.c.l.b16 %v267
    %v624 = vunpack.c.h.b16 %v267
    %v625 = vunpack.c.l.b16 %v268
    %v626 = vunpack.c.h.b16 %v268
    %v627 = vunpack.c.l.b16 %v269
    %v628 = vunpack.c.h.b16 %v269
    %v629 = vunpack.c.l.b16 %v270
    %v630 = vunpack.c.h.b16 %v270
    %v631 = vunpack.c.l.b16 %v271
    %v632 = vunpack.c.h.b16 %v271
    %v633 = vunpack.c.l.b16 %v272
    %v634 = vunpack.c.h.b16 %v272
    %v635 = vunpack.c.l.b16 %v273
    %v636 = vunpack.c.h.b16 %v273
    %v637 = vunpack.c.l.b16 %v274
    %v638 = vunpack.c.h.b16 %v274
    %v639 = vunpack.c.l.b16 %v275
    %v640 = vunpack.c.h.b16 %v275
    %v641 = vunpack.c.l.b16 %v276
    %v642 = vunpack.c.h.b16 %v276
    %v643 = vunpack.c.l.b16 %v277
    %v644 = vunpack.c.h.b16 %v277
    %v645 = vunpack.c.l.b16 %v278
    %v646 = vunpack.c.h.b16 %v278
    %v647 = vunpack.c.l.b16 %v279
    %v648 = vunpack.c.h.b16 %v279
    %v649 = vunpack.c.l.b16 %v280
    %v650 = vunpack.c.h.b16 %v280
    %v651 = vunpack.c.l.b16 %v281
    %v652 = vunpack.c.h.b16 %v281
    %v653 = vunpack.c.l.b16 %v282
    %v654 = vunpack.c.h.b16 %v282
    %v655 = vunpack.c.l.b16 %v283
    %v656 = vunpack.c.h.b16 %v283
    %v657 = vunpack.c.l.b16 %v284
    %v658 = vunpack.c.h.b16 %v284
    %v659 = vunpack.c.l.b16 %v285
    %v660 = vunpack.c.h.b16 %v285
    %v661 = vunpack.c.l.b16 %v286
    %v662 = vunpack.c.h.b16 %v286
    %v663 = vunpack.c.l.b16 %v287
    %v664 = vunpack.c.h.b16 %v287
    %v665 = vunpack.c.l.b16 %v288
    %v666 = vunpack.c.h.b16 %v288
    %v667 = vunpack.c.l.b16 %v289
    %v668 = vunpack.c.h.b16 %v289
    %v669 = vunpack.c.l.b16 %v290
    %v670 = vunpack.c.h.b16 %v290
    %v671 = vunpack.c.l.b16 %v291
    %v672 = vunpack.c.h.b16 %v291
    %v673 = vunpack.c.l.b16 %v292
    %v674 = vunpack.c.h.b16 %v292
    %v675 = vunpack.c.l.b16 %v293
    %v676 = vunpack.c.h.b16 %v293
    %v677 = vunpack.c.l.b16 %v294
    %v678 = vunpack.c.h.b16 %v294
    %v679 = vunpack.c.l.b16 %v295
    %v680 = vunpack.c.h.b16 %v295
    %v681 = vunpack.c.l.b16 %v296
    %v682 = vunpack.c.h.b16 %v296
    %v683 = vunpack.c.l.b16 %v297
    %v684 = vunpack.c.h.b16 %v297
    %v685 = vunpack.c.l.b16 %v298
    %v686 = vunpack.c.h.b16 %v298
    %v687 = vunpack.c.l.b16 %v299
    %v688 = vunpack.c.h.b16 %v299
    %v689 = vunpack.c.l.b16 %v300
    %v690 = vunpack.c.h.b16 %v300
    %v691 = vunpack.c.l.b16 %v301
    %v692 = vunpack.c.h.b16 %v301
    %v693 = vunpack.c.l.b16 %v302
    %v694 = vunpack.c.h.b16 %v302
    %v695 = vunpack.c.l.b16 %v303
    %v696 = vunpack.c.h.b16 %v303
    %v697 = vunpack.c.l.b16 %v304
    %v698 = vunpack.c.h.b16 %v304
    %v699 = vunpack.c.l.b16 %v305
    %v700 = vunpack.c.h.b16 %v305
    %v701 = vunpack.c.l.b16 %v306
    %v702 = vunpack.c.h.b16 %v306
    %v703 = vunpack.c.l.b16 %v307
    %v704 = vunpack.c.h.b16 %v307
    %v705 = vunpack.c.l.b16 %v308
    %v706 = vunpack.c.h.b16 %v308
    %v707 = vunpack.c.l.b16 %v309
    %v708 = vunpack.c.h.b16 %v309
    %v709 = vunpack.c.l.b16 %v310
    %v710 = vunpack.c.h.b16 %v310
    %v711 = vunpack.c.l.b16 %v311
    %v712 = vunpack.c.h.b16 %v311
    %v713 = vunpack.c.l.b16 %v312
    %v714 = vunpack.c.h.b16 %v312
    %v715 = vunpack.c.l.b16 %v313
    %v716 = vunpack.c.h.b16 %v313
    %v717 = vunpack.c.l.b16 %v314
    %v718 = vunpack.c.h.b16 %v314
    %v719 = vunpack.c.l.b16 %v315
    %v720 = vunpack.c.h.b16 %v315
    %v721 = vunpack.c.l.b16 %v316
    %v722 = vunpack.c.h.b16 %v316
    %v723 = vunpack.c.l.b16 %v317
    %v724 = vunpack.c.h.b16 %v317
    %v725 = vunpack.c.l.b16 %v318
    %v726 = vunpack.c.h.b16 %v318
    %v727 = vunpack.c.l.b16 %v319
    %v728 = vunpack.c.h.b16 %v319
    %v729 = vunpack.c.l.b16 %v320
    %v730 = vunpack.c.h.b16 %v320
    %v731 = vunpack.c.l.b16 %v321
    %v732 = vunpack.c.h.b16 %v321
    %v733 = vunpack.c.l.b16 %v322
    %v734 = vunpack.c.h.b16 %v322
    %v735 = vunpack.c.l.b16 %v323
    %v736 = vunpack.c.h.b16 %v323
    %v737 = vunpack.c.l.b16 %v324
    %v738 = vunpack.c.h.b16 %v324
    %v739 = vunpack.c.l.b16 %v325
    %v740 = vunpack.c.h.b16 %v325
    %v741 = vunpack.c.l.b16 %v326
    %v742 = vunpack.c.h.b16 %v326
    %v743 = vunpack.c.l.b16 %v327
    %v744 = vunpack.c.h.b16 %v327
    %v745 = vunpack.c.l.b16 %v328
    %v746 = vunpack.c.h.b16 %v328
    %v747 = vunpack.c.l.b16 %v329
    %v748 = vunpack.c.h.b16 %v329
    %v749 = vunpack.c.l.b16 %v330
    %v750 = vunpack.c.h.b16 %v330
    %v751 = vunpack.c.l.b16 %v331
    %v752 = vunpack.c.h.b16 %v331
    %v753 = vunpack.c.l.b16 %v332
    %v754 = vunpack.c.h.b16 %v332
    %v755 = vunpack.c.l.b16 %v333
    %v756 = vunpack.c.h.b16 %v333
    %v757 = vunpack.c.l.b16 %v334
    %v758 = vunpack.c.h.b16 %v334
    %v759 = vpack.c.b16 %v505, %v503
    %v760 = vpack.c.b16 %v506, %v504
    %v761 = vpack.c.b16 %v509, %v507
    %v762 = vpack.c.b16 %v510, %v508
    %v763 = vpack.c.b16 %v513, %v511
    %v764 = vpack.c.b16 %v514, %v512
    %v765 = vpack.c.b16 %v517, %v515
    %v766 = vpack.c.b16 %v518, %v516
    %v767 = vpack.c.b16 %v521, %v519
    %v768 = vpack.c.b16 %v522, %v520
    %v769 = vpack.c.b16 %v525, %v523
    %v770 = vpack.c.b16 %v526, %v524
    %v771 = vpack.c.b16 %v529, %v527
    %v772 = vpack.c.b16 %v530, %v528
    %v773 = vpack.c.b16 %v533, %v531
    %v774 = vpack.c.b16 %v534, %v532
    %v775 = vpack.c.b16 %v537, %v535
    %v776 = vpack.c.b16 %v538, %v536
    %v777 = vpack.c.b16 %v541, %v539
    %v778 = vpack.c.b16 %v542, %v540
    %v779 = vpack.c.b16 %v545, %v543
    %v780 = vpack.c.b16 %v546, %v544
    %v781 = vpack.c.b16 %v549, %v547
    %v782 = vpack.c.b16 %v550, %v548
    %v783 = vpack.c.b16 %v553, %v551
    %v784 = vpack.c.b16 %v554, %v552
    %v785 = vpack.c.b16 %v557, %v555
    %v786 = vpack.c.b16 %v558, %v556
    %v787 = vpack.c.b16 %v561, %v559
    %v788 = vpack.c.b16 %v562, %v560
    %v789 = vpack.c.b16 %v565, %v563
    %v790 = vpack.c.b16 %v566, %v564
    %v791 = vpack.c.b16 %v569, %v567
    %v792 = vpack.c.b16 %v570, %v568
    %v793 = vpack.c.b16 %v573, %v571
    %v794 = vpack.c.b16 %v574, %v572
    %v795 = vpack.c.b16 %v577, %v575
    %v796 = vpack.c.b16 %v578, %v576
    %v797 = vpack.c.b16 %v581, %v579
    %v798 = vpack.c.b16 %v582, %v580
    %v799 = vpack.c.b16 %v585, %v583
    %v800 = vpack.c.b16 %v586, %v584
    %v801 = vpack.c.b16 %v589, %v587
    %v802 = vpack.c.b16 %v590, %v588
    %v803 = vpack.c.b16 %v593, %v591
    %v804 = vpack.c.b16 %v594, %v592
    %v805 = vpack.c.b16 %v597, %v595
    %v806 = vpack.c.b16 %v598, %v596
    %v807 = vpack.c.b16 %v601, %v599
    %v808 = vpack.c.b16 %v602, %v600
    %v809 = vpack.c.b16 %v605, %v603
    %v810 = vpack.c.b16 %v606, %v604
    %v811 = vpack.c.b16 %v609, %v607
    %v812 = vpack.c.b16 %v610, %v608
    %v813 = vpack.c.b16 %v613, %v611
    %v814 = vpack.c.b16 %v614, %v612
    %v815 = vpack.c.b16 %v617, %v615
    %v816 = vpack.c.b16 %v618, %v616
    %v817 = vpack.c.b16 %v621, %v619
    %v818 = vpack.c.b16 %v622, %v620
    %v819 = vpack.c.b16 %v625, %v623
    %v820 = vpack.c.b16 %v626, %v624
    %v821 = vpack.c.b16 %v629, %v627
    %v822 = vpack.c.b16 %v630, %v628
    %v823 = vpack.c.b16 %v633, %v631
    %v824 = vpack.c.b16 %v634, %v632
    %v825 = vpack.c.b16 %v637, %v635
    %v826 = vpack.c.b16 %v638, %v636
    %v827 = vpack.c.b16 %v641, %v639
    %v828 = vpack.c.b16 %v642, %v640
    %v829 = vpack.c.b16 %v645, %v643
    %v830 = vpack.c.b16 %v646, %v644
    %v831 = vpack.c.b16 %v649, %v647
    %v832 = vpack.c.b16 %v650, %v648
    %v833 = vpack.c.b16 %v653, %v651
    %v834 = vpack.c.b16 %v654, %v652
    %v835 = vpack.c.b16 %v657, %v655
    %v836 = vpack.c.b16 %v658, %v656
    %v837 = vpack.c.b16 %v661, %v659
    %v838 = vpack.c.b16 %v662, %v660
    %v839 = vpack.c.b16 %v665, %v663
    %v840 = vpack.c.b16 %v666, %v664
    %v841 = vpack.c.b16 %v669, %v667
    %v842 = vpack.c.b16 %v670, %v668
    %v843 = vpack.c.b16 %v673, %v671
    %v844 = vpack.c.b16 %v674, %v672
    %v845 = vpack.c.b16 %v677, %v675
    %v846 = vpack.c.b16 %v678, %v676
    %v847 = vpack.c.b16 %v681, %v679
    %v848 = vpack.c.b16 %v682, %v680
    %v849 = vpack.c.b16 %v685, %v683
    %v850 = vpack.c.b16 %v686, %v684
    %v851 = vpack.c.b16 %v689, %v687
    %v852 = vpack.c.b16 %v690, %v688
    %v853 = vpack.c.b16 %v693, %v691
    %v854 = vpack.c.b16 %v694, %v692
    %v855 = vpack.c.b16 %v697, %v695
    %v856 = vpack.c.b16 %v698, %v696
    %v857 = vpack.c.b16 %v701, %v699
    %v858 = vpack.c.b16 %v702, %v700
    %v859 = vpack.c.b16 %v705, %v703
    %v860 = vpack.c.b16 %v706, %v704
    %v861 = vpack.c.b16 %v709, %v707
    %v862 = vpack.c.b16 %v710, %v708
    %v863 = vpack.c.b16 %v713, %v711
    %v864 = vpack.c.b16 %v714, %v712
    %v865 = vpack.c.b16 %v717, %v715
    %v866 = vpack.c.b16 %v718, %v716
    %v867 = vpack.c.b16 %v721, %v719
    %v868 = vpack.c.b16 %v722, %v720
    %v869 = vpack.c.b16 %v725, %v723
    %v870 = vpack.c.b16 %v726, %v724
    %v871 = vpack.c.b16 %v729, %v727
    %v872 = vpack.c.b16 %v730, %v728
    %v873 = vpack.c.b16 %v733, %v731
    %v874 = vpack.c.b16 %v734, %v732
    %v875 = vpack.c.b16 %v737, %v735
    %v876 = vpack.c.b16 %v738, %v736
    %v877 = vpack.c.b16 %v741, %v739
    %v878 = vpack.c.b16 %v742, %v740
    %v879 = vpack.c.b16 %v745, %v743
    %v880 = vpack.c.b16 %v746, %v744
    %v881 = vpack.c.b16 %v749, %v747
    %v882 = vpack.c.b16 %v750, %v748
    %v883 = vpack.c.b16 %v753, %v751
    %v884 = vpack.c.b16 %v754, %v752
    %v885 = vpack.c.b16 %v757, %v755
    %v886 = vpack.c.b16 %v758, %v756
    %1015 = vmatpush.bf16.msra.mxu0 %v773
    %1016 = vmatpush.bf16.msra.mxu0 %v771
    %1017 = vmatpush.bf16.msra.mxu0 %v769
    %1018 = vmatpush.bf16.msra.mxu0 %v767
    %1019 = vmatpush.bf16.msra.mxu0 %v765
    %1020 = vmatpush.bf16.msra.mxu0 %v763
    %1021 = vmatpush.bf16.msra.mxu0 %v761
    %1022 = vmatpush.bf16.msra.mxu0 %v759
    %1023 = vmatmul.bf16.gmra.mxu0 %v359
    %v1024 = vpop.f32.mrf.mxu0
    %v1025 = vadd.f32 0.0, %v1024
    %v1026 = vpop.f32.mrf.mxu0
    %v1027 = vadd.f32 0.0, %v1026
    %1028 = vdwg.mxu0
    %1029 = vmatpush.bf16.msra.mxu0 %v789
    %1030 = vmatpush.bf16.msra.mxu0 %v787
    %1031 = vmatpush.bf16.msra.mxu0 %v785
    %1032 = vmatpush.bf16.msra.mxu0 %v783
    %1033 = vmatpush.bf16.msra.mxu0 %v781
    %1034 = vmatpush.bf16.msra.mxu0 %v779
    %1035 = vmatpush.bf16.msra.mxu0 %v777
    %1036 = vmatpush.bf16.msra.mxu0 %v775
    %1037 = vmatmul.bf16.gmra.mxu0 %v360
    %v1038 = vpop.f32.mrf.mxu0
    %v1039 = vadd.f32 %v1025, %v1038
    %v1040 = vpop.f32.mrf.mxu0
    %v1041 = vadd.f32 %v1027, %v1040
    %1042 = vdwg.mxu0
    %1043 = vmatpush.bf16.msra.mxu0 %v805
    %1044 = vmatpush.bf16.msra.mxu0 %v803
    %1045 = vmatpush.bf16.msra.mxu0 %v801
    %1046 = vmatpush.bf16.msra.mxu0 %v799
    %1047 = vmatpush.bf16.msra.mxu0 %v797
    %1048 = vmatpush.bf16.msra.mxu0 %v795
    %1049 = vmatpush.bf16.msra.mxu0 %v793
    %1050 = vmatpush.bf16.msra.mxu0 %v791
    %1051 = vmatmul.bf16.gmra.mxu0 %v361
    %v1052 = vpop.f32.mrf.mxu0
    %v1053 = vadd.f32 %v1039, %v1052
    %v1054 = vpop.f32.mrf.mxu0
    %v1055 = vadd.f32 %v1041, %v1054
    %1056 = vdwg.mxu0
    %1057 = vmatpush.bf16.msra.mxu0 %v821
    %1058 = vmatpush.bf16.msra.mxu0 %v819
    %1059 = vmatpush.bf16.msra.mxu0 %v817
    %1060 = vmatpush.bf16.msra.mxu0 %v815
    %1061 = vmatpush.bf16.msra.mxu0 %v813
    %1062 = vmatpush.bf16.msra.mxu0 %v811
    %1063 = vmatpush.bf16.msra.mxu0 %v809
    %1064 = vmatpush.bf16.msra.mxu0 %v807
    %1065 = vmatmul.bf16.gmra.mxu0 %v362
    %v1066 = vpop.f32.mrf.mxu0
    %v1067 = vadd.f32 %v1053, %v1066
    %v1068 = vpop.f32.mrf.mxu0
    %v1069 = vadd.f32 %v1055, %v1068
    %1070 = vdwg.mxu0
    %1071 = vmatpush.bf16.msra.mxu0 %v837
    %1072 = vmatpush.bf16.msra.mxu0 %v835
    %1073 = vmatpush.bf16.msra.mxu0 %v833
    %1074 = vmatpush.bf16.msra.mxu0 %v831
    %1075 = vmatpush.bf16.msra.mxu0 %v829
    %1076 = vmatpush.bf16.msra.mxu0 %v827
    %1077 = vmatpush.bf16.msra.mxu0 %v825
    %1078 = vmatpush.bf16.msra.mxu0 %v823
    %1079 = vmatmul.bf16.gmra.mxu0 %v363
    %v1080 = vpop.f32.mrf.mxu0
    %v1081 = vadd.f32 %v1067, %v1080
    %v1082 = vpop.f32.mrf.mxu0
    %v1083 = vadd.f32 %v1069, %v1082
    %1084 = vdwg.mxu0
    %1085 = vmatpush.bf16.msra.mxu0 %v853
    %1086 = vmatpush.bf16.msra.mxu0 %v851
    %1087 = vmatpush.bf16.msra.mxu0 %v849
    %1088 = vmatpush.bf16.msra.mxu0 %v847
    %1089 = vmatpush.bf16.msra.mxu0 %v845
    %1090 = vmatpush.bf16.msra.mxu0 %v843
    %1091 = vmatpush.bf16.msra.mxu0 %v841
    %1092 = vmatpush.bf16.msra.mxu0 %v839
    %1093 = vmatmul.bf16.gmra.mxu0 %v364
    %v1094 = vpop.f32.mrf.mxu0
    %v1095 = vadd.f32 %v1081, %v1094
    %v1096 = vpop.f32.mrf.mxu0
    %v1097 = vadd.f32 %v1083, %v1096
    %1098 = vdwg.mxu0
    %1099 = vmatpush.bf16.msra.mxu0 %v869
    %1100 = vmatpush.bf16.msra.mxu0 %v867
    %1101 = vmatpush.bf16.msra.mxu0 %v865
    %1102 = vmatpush.bf16.msra.mxu0 %v863
    %1103 = vmatpush.bf16.msra.mxu0 %v861
    %1104 = vmatpush.bf16.msra.mxu0 %v859
    %1105 = vmatpush.bf16.msra.mxu0 %v857
    %1106 = vmatpush.bf16.msra.mxu0 %v855
    %1107 = vmatmul.bf16.gmra.mxu0 %v365
    %v1108 = vpop.f32.mrf.mxu0
    %v1109 = vadd.f32 %v1095, %v1108
    %v1110 = vpop.f32.mrf.mxu0
    %v1111 = vadd.f32 %v1097, %v1110
    %1112 = vdwg.mxu0
    %1113 = vmatpush.bf16.msra.mxu0 %v885
    %1114 = vmatpush.bf16.msra.mxu0 %v883
    %1115 = vmatpush.bf16.msra.mxu0 %v881
    %1116 = vmatpush.bf16.msra.mxu0 %v879
    %1117 = vmatpush.bf16.msra.mxu0 %v877
    %1118 = vmatpush.bf16.msra.mxu0 %v875
    %1119 = vmatpush.bf16.msra.mxu0 %v873
    %1120 = vmatpush.bf16.msra.mxu0 %v871
    %1121 = vmatmul.bf16.gmra.mxu0 %v366
    %v1122 = vpop.f32.mrf.mxu0
    %v1123 = vadd.f32 %v1109, %v1122
    %v1124 = vpop.f32.mrf.mxu0
    %v1125 = vadd.f32 %v1111, %v1124
    %1126 = vdwg.mxu0
    %1127 = vmatpush.bf16.msra.mxu0 %v774
    %1128 = vmatpush.bf16.msra.mxu0 %v772
    %1129 = vmatpush.bf16.msra.mxu0 %v770
    %1130 = vmatpush.bf16.msra.mxu0 %v768
    %1131 = vmatpush.bf16.msra.mxu0 %v766
    %1132 = vmatpush.bf16.msra.mxu0 %v764
    %1133 = vmatpush.bf16.msra.mxu0 %v762
    %1134 = vmatpush.bf16.msra.mxu0 %v760
    %1135 = vmatmul.bf16.gmra.mxu0 %v359
    %v1136 = vpop.f32.mrf.mxu0
    %v1137 = vadd.f32 0.0, %v1136
    %v1138 = vpop.f32.mrf.mxu0
    %v1139 = vadd.f32 0.0, %v1138
    %1140 = vdwg.mxu0
    %1141 = vmatpush.bf16.msra.mxu0 %v790
    %1142 = vmatpush.bf16.msra.mxu0 %v788
    %1143 = vmatpush.bf16.msra.mxu0 %v786
    %1144 = vmatpush.bf16.msra.mxu0 %v784
    %1145 = vmatpush.bf16.msra.mxu0 %v782
    %1146 = vmatpush.bf16.msra.mxu0 %v780
    %1147 = vmatpush.bf16.msra.mxu0 %v778
    %1148 = vmatpush.bf16.msra.mxu0 %v776
    %1149 = vmatmul.bf16.gmra.mxu0 %v360
    %v1150 = vpop.f32.mrf.mxu0
    %v1151 = vadd.f32 %v1137, %v1150
    %v1152 = vpop.f32.mrf.mxu0
    %v1153 = vadd.f32 %v1139, %v1152
    %1154 = vdwg.mxu0
    %1155 = vmatpush.bf16.msra.mxu0 %v806
    %1156 = vmatpush.bf16.msra.mxu0 %v804
    %1157 = vmatpush.bf16.msra.mxu0 %v802
    %1158 = vmatpush.bf16.msra.mxu0 %v800
    %1159 = vmatpush.bf16.msra.mxu0 %v798
    %1160 = vmatpush.bf16.msra.mxu0 %v796
    %1161 = vmatpush.bf16.msra.mxu0 %v794
    %1162 = vmatpush.bf16.msra.mxu0 %v792
    %1163 = vmatmul.bf16.gmra.mxu0 %v361
    %v1164 = vpop.f32.mrf.mxu0
    %v1165 = vadd.f32 %v1151, %v1164
    %v1166 = vpop.f32.mrf.mxu0
    %v1167 = vadd.f32 %v1153, %v1166
    %1168 = vdwg.mxu0
    %1169 = vmatpush.bf16.msra.mxu0 %v822
    %1170 = vmatpush.bf16.msra.mxu0 %v820
    %1171 = vmatpush.bf16.msra.mxu0 %v818
    %1172 = vmatpush.bf16.msra.mxu0 %v816
    %1173 = vmatpush.bf16.msra.mxu0 %v814
    %1174 = vmatpush.bf16.msra.mxu0 %v812
    %1175 = vmatpush.bf16.msra.mxu0 %v810
    %1176 = vmatpush.bf16.msra.mxu0 %v808
    %1177 = vmatmul.bf16.gmra.mxu0 %v362
    %v1178 = vpop.f32.mrf.mxu0
    %v1179 = vadd.f32 %v1165, %v1178
    %v1180 = vpop.f32.mrf.mxu0
    %v1181 = vadd.f32 %v1167, %v1180
    %1182 = vdwg.mxu0
    %1183 = vmatpush.bf16.msra.mxu0 %v838
    %1184 = vmatpush.bf16.msra.mxu0 %v836
    %1185 = vmatpush.bf16.msra.mxu0 %v834
    %1186 = vmatpush.bf16.msra.mxu0 %v832
    %1187 = vmatpush.bf16.msra.mxu0 %v830
    %1188 = vmatpush.bf16.msra.mxu0 %v828
    %1189 = vmatpush.bf16.msra.mxu0 %v826
    %1190 = vmatpush.bf16.msra.mxu0 %v824
    %1191 = vmatmul.bf16.gmra.mxu0 %v363
    %v1192 = vpop.f32.mrf.mxu0
    %v1193 = vadd.f32 %v1179, %v1192
    %v1194 = vpop.f32.mrf.mxu0
    %v1195 = vadd.f32 %v1181, %v1194
    %1196 = vdwg.mxu0
    %1197 = vmatpush.bf16.msra.mxu0 %v854
    %1198 = vmatpush.bf16.msra.mxu0 %v852
    %1199 = vmatpush.bf16.msra.mxu0 %v850
    %1200 = vmatpush.bf16.msra.mxu0 %v848
    %1201 = vmatpush.bf16.msra.mxu0 %v846
    %1202 = vmatpush.bf16.msra.mxu0 %v844
    %1203 = vmatpush.bf16.msra.mxu0 %v842
    %1204 = vmatpush.bf16.msra.mxu0 %v840
    %1205 = vmatmul.bf16.gmra.mxu0 %v364
    %v1206 = vpop.f32.mrf.mxu0
    %v1207 = vadd.f32 %v1193, %v1206
    %v1208 = vpop.f32.mrf.mxu0
    %v1209 = vadd.f32 %v1195, %v1208
    %1210 = vdwg.mxu0
    %1211 = vmatpush.bf16.msra.mxu0 %v870
    %1212 = vmatpush.bf16.msra.mxu0 %v868
    %1213 = vmatpush.bf16.msra.mxu0 %v866
    %1214 = vmatpush.bf16.msra.mxu0 %v864
    %1215 = vmatpush.bf16.msra.mxu0 %v862
    %1216 = vmatpush.bf16.msra.mxu0 %v860
    %1217 = vmatpush.bf16.msra.mxu0 %v858
    %1218 = vmatpush.bf16.msra.mxu0 %v856
    %1219 = vmatmul.bf16.gmra.mxu0 %v365
    %v1220 = vpop.f32.mrf.mxu0
    %v1221 = vadd.f32 %v1207, %v1220
    %v1222 = vpop.f32.mrf.mxu0
    %v1223 = vadd.f32 %v1209, %v1222
    %1224 = vdwg.mxu0
    %1225 = vmatpush.bf16.msra.mxu0 %v886
    %1226 = vmatpush.bf16.msra.mxu0 %v884
    %1227 = vmatpush.bf16.msra.mxu0 %v882
    %1228 = vmatpush.bf16.msra.mxu0 %v880
    %1229 = vmatpush.bf16.msra.mxu0 %v878
    %1230 = vmatpush.bf16.msra.mxu0 %v876
    %1231 = vmatpush.bf16.msra.mxu0 %v874
    %1232 = vmatpush.bf16.msra.mxu0 %v872
    %1233 = vmatmul.bf16.gmra.mxu0 %v366
    %v1234 = vpop.f32.mrf.mxu0
    %v1235 = vadd.f32 %v1221, %v1234
    %v1236 = vpop.f32.mrf.mxu0
    %v1237 = vadd.f32 %v1223, %v1236
    %1238 = vdwg.mxu0
    %1239 = vst [vmem:[%s3] sm:$0xff] %v1123
    %1240 = vst [vmem:[%s3 + $0x8] sm:$0xff] %v1235
    %1241 = vst [vmem:[%s3 + $0x10] sm:$0xff] %v1125
    %1242 = vst [vmem:[%s3 + $0x18] sm:$0xff] %v1237
    // Predicated region
    $region10: #{visual_adapter_forward.2} parent=1 // pred_check
      _
    $region11: #{visual_adapter_forward.2} parent=1 // pred_check_branch
      %1244 = sbr.rel (0) target = $region13
    $region12: #{visual_adapter_forward.2} parent=1 // pred_region
      _
    $region13: #{visual_adapter_forward.2} parent=1 // pred_fallthru
      _
    // Predicated region
    $region14: #{visual_adapter_forward.2} parent=1 // pred_check
      _
    $region15: #{visual_adapter_forward.2} parent=1 // pred_check_branch
      %1246 = sbr.rel (0) target = $region17
    $region16: #{visual_adapter_forward.2} parent=1 // pred_region
      _
    $region17: #{visual_adapter_forward.2} parent=1 // pred_fallthru
      _

</llo_original>
